<compile_context>
chip_gen: v7x
topology: tpu7x:2x2x1
jax: 0.10.0
libtpu: 0.0.40
codegen_flags: <defaults>
</compile_context>

<pallas_src>
import functools

import jax
import jax.numpy as jnp
from jax.experimental import pallas as pl
from jax.experimental.pallas import tpu as pltpu

IN_DIM = 23
SPACE_DIM = 3
PROP_DIM = 3
SH_DIM = SPACE_DIM + PROP_DIM          # 6  (s | h)
FUSED_DIM = SH_DIM + IN_DIM            # 29 (s | h | lin_out1, with lin_out2 bias folded in)
K = 2
EPS = 1e-6
BIG = 1e30
IDX_SENTINEL = 2 ** 30


def _round_up(x, m):
    return ((x + m - 1) // m) * m


# ----------------------------- stage 1: candidate projection -----------------------------
def candidate_proj_kernel(x_ref, w_ref, b_ref, s_aug_ref, hc_ref, *, n_valid, tc):
    """Per candidate chunk: s = x@ws+bs, h = x@wh+bh; emit [s | |s|^2(masked)] and bf16 h."""
    j = pl.program_id(0)
    x = x_ref[...].astype(jnp.float32)                                   # [TC, 23]
    sh = jnp.dot(x, w_ref[...], preferred_element_type=jnp.float32) + b_ref[...]
    s = sh[:, :SPACE_DIM]                                                # [TC, 3]
    h = sh[:, SPACE_DIM:]                                                # [TC, 3]
    hc_ref[...] = h.astype(jnp.bfloat16)                                 # bf16 gather RHS

    sq = jnp.sum(s * s, axis=1, keepdims=True)                           # [TC, 1]
    # Bake the padding mask into |s|^2 so padded candidates are never selected.
    gcol = j * tc + jax.lax.broadcasted_iota(jnp.int32, sq.shape, 0)
    sq = jnp.where(gcol < n_valid, sq, jnp.float32(BIG))
    s_aug_ref[...] = jnp.concatenate([s, sq], axis=1)                    # [TC, 4]


# ------------------------ stage 2: streamed, tiled GravNet conv ---------------------------
def gravnet_tile_kernel(x_ref, slab_ref, hc_ref, w_in_ref, b_in_ref, w2_ref, out_ref,
                        proj_ref, dmin_ref, neigh_ref):
    i = pl.program_id(0)                      # query tile ("parallel")
    k = pl.program_id(1)                      # candidate chunk (reduction, "arbitrary")

    tq = out_ref.shape[0]
    tc = slab_ref.shape[1]

    # Per-query-tile init: one fused projection x_q @ [ws|wh|w1] + [bs|bh|b2] and a reset
    # of the running nearest-neighbour state.
    @pl.when(k == 0)
    def _():
        x = x_ref[...].astype(jnp.float32)                               # [TQ, 23]
        proj_ref[...] = (jnp.dot(x, w_in_ref[...], preferred_element_type=jnp.float32)
                         + b_in_ref[...])
        dmin_ref[...] = jnp.full(dmin_ref.shape, BIG, jnp.float32)
        neigh_ref[...] = jnp.zeros(neigh_ref.shape, jnp.float32)

    s_q = proj_ref[:, :SPACE_DIM]                                        # [TQ, 3]

    slab = slab_ref[...]                                                 # [4, TC]: s^T rows, |s|^2
    s0 = slab[0:1, :]
    s1 = slab[1:2, :]
    s2 = slab[2:3, :]
    sq_c = slab[3:4, :]                                                  # padded cols = BIG

    # Pairwise squared distances on the VPU (no MXU pass for the K=3 cross term):
    #   d = |q|^2 + |c|^2 - 2*(q0*c0 + q1*c1 + q2*c2)
    sq_q = jnp.sum(s_q * s_q, axis=1, keepdims=True)                     # [TQ, 1]
    d = sq_q + sq_c
    d = d - 2.0 * (s_q[:, 0:1] * s0)
    d = d - 2.0 * (s_q[:, 1:2] * s1)
    d = d - 2.0 * (s_q[:, 2:3] * s2)
    d = jnp.maximum(d, 0.0)

    # Exclude self from the search (self is handled analytically in the epilogue).
    col = k * tc + jax.lax.broadcasted_iota(jnp.int32, (tq, tc), 1)      # global candidate idx
    row = i * tq + jax.lax.broadcasted_iota(jnp.int32, (tq, 1), 0)       # global query idx
    d = jnp.where(col == row, jnp.float32(BIG), d)

    # Chunk-local nearest neighbour (tie-break: smallest column index).
    d_blk = jnp.min(d, axis=1, keepdims=True)                            # [TQ, 1]
    idx = jnp.where(d <= d_blk, col, jnp.int32(IDX_SENTINEL))
    amin = jnp.min(idx, axis=1, keepdims=True)                           # [TQ, 1]
    onehot = jnp.where(col == amin, 1.0, 0.0).astype(jnp.bfloat16)       # [TQ, TC]
    neigh_blk = jnp.dot(onehot, hc_ref[...],
                        preferred_element_type=jnp.float32)              # [TQ, 3]  (bf16 MXU)

    # Online argmin update: strict '<' keeps the earliest (smallest-index) winner.
    better = d_blk < dmin_ref[...]
    dmin_ref[...] = jnp.where(better, d_blk, dmin_ref[...])
    neigh_ref[...] = jnp.where(better, neigh_blk, neigh_ref[...])

    # Epilogue on the last candidate chunk.
    @pl.when(k == pl.num_programs(1) - 1)
    def _():
        proj = proj_ref[...]
        h_q = proj[:, SPACE_DIM:SH_DIM]                                  # [TQ, 3]
        xw1 = proj[:, SH_DIM:]                                           # [TQ, 23] (b2 folded in)
        msg = jnp.exp(-10.0 * dmin_ref[...]) * neigh_ref[...]
        # Self neighbour: d = 0 exactly -> weight exp(0) = 1 -> message is h_q itself.
        mmean = 0.5 * (h_q + msg)
        mmax = jnp.maximum(h_q, msg)
        agg = jnp.concatenate([mmean, mmax], axis=1)                     # [TQ, 6]
        out_ref[...] = xw1 + jnp.dot(agg, w2_ref[...],
                                     preferred_element_type=jnp.float32)


# ----------------------------------- wrapper ---------------------------------------------
def gravnet_forward(x, params, *, tq=256, tc=512):
    """x: [N, IN_DIM] float32.  Returns dict {'B': [N], 'H': [N, IN_DIM]}."""
    n, f = x.shape
    assert f == IN_DIM
    assert n >= 2, "k=2 kNN needs at least 2 nodes"

    # Candidate chunking: multiples of 128 (lane-aligned), no larger than needed.
    tc = max(128, min(_round_up(tc, 128), _round_up(n, 128)))
    n_cand = _round_up(n, tc)

    # Query tiling: multiples of 8; keep >= 2 tiles so v7x megacore uses both cores.
    tq = max(8, min(_round_up(tq, 8), _round_up(n, 8)))
    if _round_up(n, tq) // tq < 2 and n > 8:
        tq = _round_up(max(8, (n + 1) // 2), 8)
    n_q = _round_up(n, tq)

    n_max = max(n_q, n_cand)
    x_p = jnp.pad(x, ((0, n_max - n), (0, 0))) if n_max > n else x

    w_in = params["w_in"].astype(jnp.float32)      # [23, 29] = [ws | wh | w1]
    b_in = params["b_in"].astype(jnp.float32)      # [1, 29]  = [bs | bh | b2]
    w2 = params["w2"].astype(jnp.float32)          # [6, 23]

    # --- stage 1: per-chunk candidate projection (s, masked |s|^2, bf16 h) ---
    s_aug, h_c = pl.pallas_call(
        functools.partial(candidate_proj_kernel, n_valid=n, tc=tc),
        out_shape=(
            jax.ShapeDtypeStruct((n_cand, SPACE_DIM + 1), jnp.float32),
            jax.ShapeDtypeStruct((n_cand, PROP_DIM), jnp.bfloat16),
        ),
        grid=(n_cand // tc,),
        in_specs=[
            pl.BlockSpec((tc, IN_DIM), lambda j: (j, 0)),
            pl.BlockSpec((IN_DIM, SH_DIM), lambda j: (0, 0)),
            pl.BlockSpec((1, SH_DIM), lambda j: (0, 0)),
        ],
        out_specs=(
            pl.BlockSpec((tc, SPACE_DIM + 1), lambda j: (j, 0)),
            pl.BlockSpec((tc, PROP_DIM), lambda j: (j, 0)),
        ),
        compiler_params=pltpu.CompilerParams(dimension_semantics=("parallel",)),
    )(x_p, w_in[:, :SH_DIM], b_in[:, :SH_DIM])

    # Tiny [n_cand, 4] -> [4, n_cand] transpose (16 B/row) in XLA so stage 2 can broadcast
    # candidate coordinates along lanes without any per-tile XLU transpose.
    cand_slab = s_aug.T

    grid = (n_q // tq, n_cand // tc)
    cost = pl.CostEstimate(
        flops=int(9 * n_q * n_cand                       # VPU distance expansion
                  + 2 * n_q * n_cand * PROP_DIM          # one-hot gather (bf16 MXU)
                  + 2 * n_q * IN_DIM * FUSED_DIM         # fused input projection
                  + 2 * n_cand * IN_DIM * SH_DIM         # stage-1 projection
                  + 2 * n_q * 2 * PROP_DIM * IN_DIM),    # epilogue matmul
        transcendentals=int(n_q),
        bytes_accessed=int(4 * (n_q + n_cand) * IN_DIM
                           + 4 * n_cand * (SPACE_DIM + 1)
                           + 2 * n_cand * PROP_DIM
                           + 4 * n_q * IN_DIM
                           + 4 * (IN_DIM * FUSED_DIM + 2 * PROP_DIM * IN_DIM)),
    )

    latent = pl.pallas_call(
        gravnet_tile_kernel,
        out_shape=jax.ShapeDtypeStruct((n_q, IN_DIM), jnp.float32),
        grid=grid,
        in_specs=[
            pl.BlockSpec((tq, IN_DIM), lambda i, k: (i, 0)),            # query tile
            pl.BlockSpec((SPACE_DIM + 1, tc), lambda i, k: (0, k)),     # streamed s^T / |s|^2
            pl.BlockSpec((tc, PROP_DIM), lambda i, k: (k, 0)),          # streamed bf16 h
            pl.BlockSpec((IN_DIM, FUSED_DIM), lambda i, k: (0, 0)),     # fused W_in (resident)
            pl.BlockSpec((1, FUSED_DIM), lambda i, k: (0, 0)),          # fused b_in (resident)
            pl.BlockSpec((2 * PROP_DIM, IN_DIM), lambda i, k: (0, 0)),  # W2 (resident)
        ],
        out_specs=pl.BlockSpec((tq, IN_DIM), lambda i, k: (i, 0)),
        scratch_shapes=[
            pltpu.VMEM((tq, FUSED_DIM), jnp.float32),   # fused projection of the query tile
            pltpu.VMEM((tq, 1), jnp.float32),           # running dmin
            pltpu.VMEM((tq, PROP_DIM), jnp.float32),    # running neighbour h
        ],
        compiler_params=pltpu.CompilerParams(
            dimension_semantics=("parallel", "arbitrary"),
            vmem_limit_bytes=48 * 1024 * 1024,   # headroom under v7x's 64 MiB; ample (streamed)
        ),
        cost_estimate=cost,
    )(x_p, cand_slab, h_c, w_in, b_in, w2)

    latent = latent[:n]

    # Beta head in plain JAX (keeps kernel stores lane-dense; [N,1] would be a masked vst).
    logit = latent @ params["wb"] + params["bb"]
    beta = jnp.clip(jax.nn.sigmoid(logit), EPS, 1.0 - EPS)
    return {"B": beta[:, 0], "H": latent}


# -------------------------------- params / reference -------------------------------------
def init_params(key):
    """Deterministic synthetic parameters (shapes match the torch module), pre-fused."""
    ks = jax.random.split(key, 5)

    def lin(k, fan_in, fan_out, bias=True):
        bound = 1.0 / jnp.sqrt(jnp.float32(fan_in))
        kw, kb = jax.random.split(k)
        w = jax.random.uniform(kw, (fan_in, fan_out), jnp.float32, -bound, bound)
        b = (jax.random.uniform(kb, (1, fan_out), jnp.float32, -bound, bound)
             if bias else jnp.zeros((1, fan_out), jnp.float32))
        return w, b

    ws, bs = lin(ks[0], IN_DIM, SPACE_DIM)            # lin_s
    wh, bh = lin(ks[1], IN_DIM, PROP_DIM)             # lin_h
    w1, _ = lin(ks[2], IN_DIM, IN_DIM, bias=False)    # lin_out1 (no bias)
    w2, b2 = lin(ks[3], 2 * PROP_DIM, IN_DIM)         # lin_out2
    wb, bb = lin(ks[4], IN_DIM, 1)                    # beta head

    return {
        "w_in": jnp.concatenate([ws, wh, w1], axis=1),   # [23, 29]
        "b_in": jnp.concatenate([bs, bh, b2], axis=1),   # [1, 29]
        "w2": w2,                                        # [6, 23]
        "wb": wb, "bb": bb,                              # [23, 1], [1, 1]
    }


def gravnet_reference(x, params):
    """Pure-JAX reference for correctness checking."""
    hi = jax.lax.Precision.HIGHEST
    proj = jnp.dot(x, params["w_in"], precision=hi) + params["b_in"]
    s, h, xw1 = proj[:, :SPACE_DIM], proj[:, SPACE_DIM:SH_DIM], proj[:, SH_DIM:]
    n = x.shape[0]
    d = jnp.sum((s[:, None, :] - s[None, :, :]) ** 2, axis=-1)
    d = d + jnp.eye(n, dtype=d.dtype) * BIG                    # exclude self from the search
    j = jnp.argmin(d, axis=1)
    w = jnp.exp(-10.0 * d[jnp.arange(n), j])
    msg = w[:, None] * h[j]
    mmean = 0.5 * (h + msg)                                    # self message is h (weight 1)
    mmax = jnp.maximum(h, msg)
    latent = xw1 + jnp.dot(jnp.concatenate([mmean, mmax], axis=1), params["w2"], precision=hi)
    beta = jnp.clip(jax.nn.sigmoid(latent @ params["wb"] + params["bb"]), EPS, 1.0 - EPS)
    return {"B": beta[:, 0], "H": latent}


def _check(out, ref, n):
    assert out["H"].shape == (n, IN_DIM)
    assert out["B"].shape == (n,)
    assert jnp.allclose(out["H"], ref["H"], atol=3e-2, rtol=3e-2), (
        "H mismatch, max abs err = %g" % float(jnp.max(jnp.abs(out["H"] - ref["H"]))))
    assert jnp.allclose(out["B"], ref["B"], atol=3e-2, rtol=3e-2), (
        "B mismatch, max abs err = %g" % float(jnp.max(jnp.abs(out["B"] - ref["B"]))))
    assert bool(jnp.all(out["B"] >= EPS)) and bool(jnp.all(out["B"] <= 1.0 - EPS))


if __name__ == "__main__":
    key = jax.random.PRNGKey(0)
    kx1, kx2, kp = jax.random.split(key, 3)
    params = init_params(kp)

    # Config 1: multi-chunk candidate streaming (3 chunks) + 3 query tiles + padding.
    N1 = 300
    x1 = jax.random.normal(kx1, (N1, IN_DIM), dtype=jnp.float32)
    out1 = gravnet_forward(x1, params, tq=128, tc=128)
    jax.block_until_ready(out1)
    _check(out1, gravnet_reference(x1, params), N1)

    # Config 2: defaults (single candidate chunk; tq auto-shrunk so the query grid >= 2).
    N2 = 40
    x2 = jax.random.normal(kx2, (N2, IN_DIM), dtype=jnp.float32)
    out2 = gravnet_forward(x2, params)
    jax.block_until_ready(out2)
    _check(out2, gravnet_reference(x2, params), N2)

    print("KERNEL_OK")
</pallas_src>

<mosaic_0001>
module attributes {stable_mosaic.version = 11 : i64} {
  func.func @candidate_proj_kernel(%arg0: i32, %arg1: memref<128x23xf32, #tpu.memory_space<vmem>>, %arg2: memref<23x6xf32, #tpu.memory_space<vmem>>, %arg3: memref<1x6xf32, #tpu.memory_space<vmem>>, %arg4: memref<128x4xf32, #tpu.memory_space<vmem>>, %arg5: memref<128x3xbf16, #tpu.memory_space<vmem>>) attributes {dimension_semantics = [#tpu.dimension_semantics<parallel>], iteration_bounds = array<i64: 3>, scalar_prefetch = 0 : i64, scratch_operands = 0 : i64, tpu.core_type = #tpu.core_type<tc>, window_params = [{transform_indices = @transform_0, window_bounds = array<i64: 128, 23>}, {pipeline_mode = #tpu.pipeline_mode<synchronous>, transform_indices = @transform_1, window_bounds = array<i64: 23, 6>}, {pipeline_mode = #tpu.pipeline_mode<synchronous>, transform_indices = @transform_2, window_bounds = array<i64: 1, 6>}, {transform_indices = @transform_3, window_bounds = array<i64: 128, 4>}, {transform_indices = @transform_4, window_bounds = array<i64: 128, 3>}]} {
    %c0 = arith.constant 0 : index
    %c0_0 = arith.constant 0 : index
    %0 = vector.load %arg1[%c0, %c0_0] : memref<128x23xf32, #tpu.memory_space<vmem>>, vector<128x23xf32>
    %c0_1 = arith.constant 0 : index
    %c0_2 = arith.constant 0 : index
    %1 = vector.load %arg2[%c0_1, %c0_2] : memref<23x6xf32, #tpu.memory_space<vmem>>, vector<23x6xf32>
    %cst = arith.constant dense<0.000000e+00> : vector<128x6xf32>
    %2 = tpu.matmul %0, %1, %cst {dimension_numbers = #tpu.dot_dimension_numbers<[1], [0], [0], [1], [0, 0, 1, 1], [], []>} : vector<128x23xf32>, vector<23x6xf32>, vector<128x6xf32> -> vector<128x6xf32>
    %c0_3 = arith.constant 0 : index
    %c0_4 = arith.constant 0 : index
    %3 = vector.load %arg3[%c0_3, %c0_4] : memref<1x6xf32, #tpu.memory_space<vmem>>, vector<1x6xf32>
    %4 = vector.broadcast %3 : vector<1x6xf32> to vector<128x6xf32>
    %5 = arith.addf %2, %4 : vector<128x6xf32>
    %6 = vector.extract_strided_slice %5 {offsets = [0, 0], sizes = [128, 3], strides = [1, 1]} : vector<128x6xf32> to vector<128x3xf32>
    %7 = vector.extract_strided_slice %5 {offsets = [0, 3], sizes = [128, 3], strides = [1, 1]} : vector<128x6xf32> to vector<128x3xf32>
    %8 = arith.truncf %7 : vector<128x3xf32> to vector<128x3xbf16>
    %c0_5 = arith.constant 0 : index
    %c0_6 = arith.constant 0 : index
    %9 = vector.load %arg5[%c0_5, %c0_6] : memref<128x3xbf16, #tpu.memory_space<vmem>>, vector<128x3xbf16>
    tpu.vector_store %arg5[%c0_5, %c0_6], %8 {strides = array<i32>} : memref<128x3xbf16, #tpu.memory_space<vmem>>, vector<128x3xbf16>,
    %10 = arith.mulf %6, %6 : vector<128x3xf32>
    %cst_7 = arith.constant dense<0.000000e+00> : vector<128xf32>
    %11 = vector.multi_reduction <add>, %10, %cst_7 [1] : vector<128x3xf32> to vector<128xf32>
    %12 = vector.shape_cast %11 : vector<128xf32> to vector<128x1xf32>
    %c128_i32 = arith.constant 128 : i32
    %13 = arith.muli %arg0, %c128_i32 : i32
    %14 = tpu.iota {dimensions = array<i32: 0>} : vector<128x1xi32>
    %15 = vector.broadcast %13 : i32 to vector<128x1xi32>
    %16 = arith.addi %15, %14 : vector<128x1xi32>
    %c300_i32 = arith.constant 300 : i32
    %17 = vector.broadcast %c300_i32 : i32 to vector<128x1xi32>
    %18 = arith.cmpi slt, %16, %17 : vector<128x1xi32>
    %cst_8 = arith.constant 1.000000e+30 : f32
    %19 = vector.broadcast %cst_8 : f32 to vector<128x1xf32>
    %20 = arith.select %18, %12, %19 : vector<128x1xi1>, vector<128x1xf32>
    %21 = tpu.concatenate %6, %20 in 1 : vector<128x3xf32>, vector<128x1xf32> -> vector<128x4xf32>
    %c0_9 = arith.constant 0 : index
    %c0_10 = arith.constant 0 : index
    %22 = vector.load %arg4[%c0_9, %c0_10] : memref<128x4xf32, #tpu.memory_space<vmem>>, vector<128x4xf32>
    tpu.vector_store %arg4[%c0_9, %c0_10], %21 {strides = array<i32>} : memref<128x4xf32, #tpu.memory_space<vmem>>, vector<128x4xf32>,
    return
  }
  func.func @transform_0(%arg0: i32) -> (i32, i32) {
    %c0_i32 = arith.constant 0 : i32
    %c0_i32_0 = arith.constant 0 : i32
    return %arg0, %c0_i32 : i32, i32
  }
  func.func @transform_1(%arg0: i32) -> (i32, i32) {
    %c0_i32 = arith.constant 0 : i32
    %c0_i32_0 = arith.constant 0 : i32
    %c0_i32_1 = arith.constant 0 : i32
    return %c0_i32, %c0_i32_0 : i32, i32
  }
  func.func @transform_2(%arg0: i32) -> (i32, i32) {
    %c0_i32 = arith.constant 0 : i32
    %c0_i32_0 = arith.constant 0 : i32
    %c0_i32_1 = arith.constant 0 : i32
    return %c0_i32, %c0_i32_0 : i32, i32
  }
  func.func @transform_3(%arg0: i32) -> (i32, i32) {
    %c0_i32 = arith.constant 0 : i32
    %c0_i32_0 = arith.constant 0 : i32
    return %arg0, %c0_i32 : i32, i32
  }
  func.func @transform_4(%arg0: i32) -> (i32, i32) {
    %c0_i32 = arith.constant 0 : i32
    %c0_i32_0 = arith.constant 0 : i32
    return %arg0, %c0_i32 : i32, i32
  }
}

</mosaic_0001>

<llo_original>
// kernel: tpu_custom_call.1
$region0: #{tpu_custom_call.1}
  #allocation0 [shape = 'u32[]', space=smem, size = 0x4, offset = 0x4, fixed_abs, tag = 'smem constant byte address 0x4 - core index']
  #allocation1 [shape = 'u32[144,128]{1,0:T(1,128)}', space=vmem, size = 0x12000, scoped, tag = 'internal scratch']
  %s0 = inlined_call_operand.vmem [shape: f32[384,23], index: 0, kind: input, shape index: {}]
  %s1 = inlined_call_operand.vmem [shape: f32[23,6], index: 1, kind: input, shape index: {}]
  %s2 = inlined_call_operand.vmem [shape: f32[1,6], index: 2, kind: input, shape index: {}]
  %s3 = inlined_call_operand.vmem [shape: f32[384,4], index: 3, kind: output, shape index: {0}]
  %s4 = inlined_call_operand.vmem [shape: bf16[384,3], index: 4, kind: output, shape index: {1}]
  %5 = xla_tuple %s3, %s4
  %s6 = sld [smem:[#allocation0]]
  $region53: #{tpu_custom_call.1} parent=0
    _
  %s8 = ssub.s32 1, %s6
  %s9 = scalar_select 0, %s8, %s6
  loop: start=0, step=1, limit=5
  $region2: #{tpu_custom_call.1} parent=0 // loop_pre_header
    _
  $region3: #{tpu_custom_call.1} parent=0 // loop_header
    %s11 = sphi 0, %s15
    %p12 = scmp.ge.s32.totalorder %s11, 5
    %s21 = sphi 0, %s23
    %s24 = sphi 0, %s21
    %s25 = sphi 0, %s24
    %s41 = sphi 0, %s25
    %s45 = sphi 0, %s45
    %s47 = sphi 0, %s45
    %s48 = sphi 0, %s47
    %s62 = sphi 0, %s48
    %s66 = sphi 0, %s66
    %s68 = sphi 0, %s66
    %s69 = sphi 0, %s68
    %s83 = sphi 0, %s69
    %s89 = sphi 0, %s91
    %s92 = sphi 0, %s89
    %s93 = sphi 0, %s92
    %s109 = sphi 0, %s93
    %s115 = sphi 0, %s117
    %s118 = sphi 0, %s115
    %s119 = sphi 0, %s118
    %s135 = sphi 0, %s119
  $region4: #{tpu_custom_call.1} parent=0 // loop_header_branch
    %14 = sbr.rel (%p12) target = $region8
  $region5: #{tpu_custom_call.1} parent=0 // loop_body
    %s16 = ssub.s32 %s11, 1
    %s17 = ssub.s32 %s11, 2
    %s18 = sadd.s32 %s11, 1
    %s19 = ssub.s32 %s11, %s18
    %p20 = scmp.eq.s32.totalorder %s19, 0
    %s22 = sadd.s32 %s21, 1
    %s23 = scalar_select %p20, %s21, %s22
    %p26 = pneg %p20
    %p27 = scmp.eq.s32.totalorder %s11, 2
    %p28 = por %p26, %p27
    %p29 = scmp.ne.s32.totalorder %s21, %s24
    %p30 = scmp.eq.s32.totalorder %s11, 0
    %p31 = por %p29, %p30
    %p32 = scmp.ne.s32.totalorder %s21, %s24
    %p33 = scmp.eq.s32.totalorder %s16, 2
    %p34 = por %p32, %p33
    %p35 = scmp.ne.s32.totalorder %s24, %s25
    %p36 = scmp.eq.s32.totalorder %s16, 0
    %p37 = por %p35, %p36
    %p38 = scmp.ne.s32.totalorder %s24, %s25
    %p39 = scmp.eq.s32.totalorder %s17, 2
    %p40 = por %p38, %p39
    %p42 = scmp.ne.s32.totalorder %s25, %s41
    %p43 = scmp.eq.s32.totalorder %s17, 0
    %p44 = por %p42, %p43
    %s46 = sadd.s32 %s45, 1
    %p49 = scmp.eq.s32.totalorder %s11, 2
    %p50 = scmp.ne.s32.totalorder %s45, %s47
    %p51 = scmp.eq.s32.totalorder %s11, 0
    %p52 = por %p50, %p51
    %p53 = scmp.ne.s32.totalorder %s45, %s47
    %p54 = scmp.eq.s32.totalorder %s16, 2
    %p55 = por %p53, %p54
    %p56 = scmp.ne.s32.totalorder %s47, %s48
    %p57 = scmp.eq.s32.totalorder %s16, 0
    %p58 = por %p56, %p57
    %p59 = scmp.ne.s32.totalorder %s47, %s48
    %p60 = scmp.eq.s32.totalorder %s17, 2
    %p61 = por %p59, %p60
    %p63 = scmp.ne.s32.totalorder %s48, %s62
    %p64 = scmp.eq.s32.totalorder %s17, 0
    %p65 = por %p63, %p64
    %s67 = sadd.s32 %s66, 1
    %p70 = scmp.eq.s32.totalorder %s11, 2
    %p71 = scmp.ne.s32.totalorder %s66, %s68
    %p72 = scmp.eq.s32.totalorder %s11, 0
    %p73 = por %p71, %p72
    %p74 = scmp.ne.s32.totalorder %s66, %s68
    %p75 = scmp.eq.s32.totalorder %s16, 2
    %p76 = por %p74, %p75
    %p77 = scmp.ne.s32.totalorder %s68, %s69
    %p78 = scmp.eq.s32.totalorder %s16, 0
    %p79 = por %p77, %p78
    %p80 = scmp.ne.s32.totalorder %s68, %s69
    %p81 = scmp.eq.s32.totalorder %s17, 2
    %p82 = por %p80, %p81
    %p84 = scmp.ne.s32.totalorder %s69, %s83
    %p85 = scmp.eq.s32.totalorder %s17, 0
    %p86 = por %p84, %p85
    %s87 = ssub.s32 %s11, %s18
    %p88 = scmp.eq.s32.totalorder %s87, 0
    %s90 = sadd.s32 %s89, 1
    %s91 = scalar_select %p88, %s89, %s90
    %p94 = pneg %p88
    %p95 = scmp.eq.s32.totalorder %s11, 2
    %p96 = por %p94, %p95
    %p97 = scmp.ne.s32.totalorder %s89, %s92
    %p98 = scmp.eq.s32.totalorder %s11, 0
    %p99 = por %p97, %p98
    %p100 = scmp.ne.s32.totalorder %s89, %s92
    %p101 = scmp.eq.s32.totalorder %s16, 2
    %p102 = por %p100, %p101
    %p103 = scmp.ne.s32.totalorder %s92, %s93
    %p104 = scmp.eq.s32.totalorder %s16, 0
    %p105 = por %p103, %p104
    %p106 = scmp.ne.s32.totalorder %s92, %s93
    %p107 = scmp.eq.s32.totalorder %s17, 2
    %p108 = por %p106, %p107
    %p110 = scmp.ne.s32.totalorder %s93, %s109
    %p111 = scmp.eq.s32.totalorder %s17, 0
    %p112 = por %p110, %p111
    %s113 = ssub.s32 %s11, %s18
    %p114 = scmp.eq.s32.totalorder %s113, 0
    %s116 = sadd.s32 %s115, 1
    %s117 = scalar_select %p114, %s115, %s116
    %p120 = pneg %p114
    %p121 = scmp.eq.s32.totalorder %s11, 2
    %p122 = por %p120, %p121
    %p123 = scmp.ne.s32.totalorder %s115, %s118
    %p124 = scmp.eq.s32.totalorder %s11, 0
    %p125 = por %p123, %p124
    %p126 = scmp.ne.s32.totalorder %s115, %s118
    %p127 = scmp.eq.s32.totalorder %s16, 2
    %p128 = por %p126, %p127
    %p129 = scmp.ne.s32.totalorder %s118, %s119
    %p130 = scmp.eq.s32.totalorder %s16, 0
    %p131 = por %p129, %p130
    %p132 = scmp.ne.s32.totalorder %s118, %s119
    %p133 = scmp.eq.s32.totalorder %s17, 2
    %p134 = por %p132, %p133
    %p136 = scmp.ne.s32.totalorder %s119, %s135
    %p137 = scmp.eq.s32.totalorder %s17, 0
    %p138 = por %p136, %p137
    %p139 = scmp.le.s32.totalorder 1, %s11
    %p140 = scmp.lt.s32.totalorder %s11, 4
    %p141 = pnand %p139, %p140
    %p142 = pneg %p141
    // Predicated region
    $region9: #{tpu_custom_call.1} parent=5 // pred_check
      _
    $region10: #{tpu_custom_call.1} parent=5 // pred_check_branch
      %144 = sbr.rel (%p141) target = $region12
    $region11: #{tpu_custom_call.1} parent=5 // pred_region
      %s145 = ssub.s32 %s11, 1
      // Predicated region
      $region13: #{tpu_custom_call.1} parent=11 // pred_check
        %p146 = pneg %p58
      $region14: #{tpu_custom_call.1} parent=11 // pred_check_branch
        %148 = sbr.rel (%p146) target = $region16
      $region15: #{tpu_custom_call.1} parent=11 // pred_region
        _
      $region16: #{tpu_custom_call.1} parent=11 // pred_fallthru
        _
      // Predicated region
      $region17: #{tpu_custom_call.1} parent=11 // pred_check
        %p149 = pneg %p79
      $region18: #{tpu_custom_call.1} parent=11 // pred_check_branch
        %151 = sbr.rel (%p149) target = $region20
      $region19: #{tpu_custom_call.1} parent=11 // pred_region
        _
      $region20: #{tpu_custom_call.1} parent=11 // pred_fallthru
        _
    $region12: #{tpu_custom_call.1} parent=5 // pred_fallthru
      _
    %p152 = scmp.lt.s32.totalorder %s11, 3
    // Predicated region
    $region21: #{tpu_custom_call.1} parent=5 // pred_check
      %p153 = pneg %p152
    $region22: #{tpu_custom_call.1} parent=5 // pred_check_branch
      %155 = sbr.rel (%p153) target = $region24
    $region23: #{tpu_custom_call.1} parent=5 // pred_region
      // Predicated region
      $region25: #{tpu_custom_call.1} parent=23 // pred_check
        %p156 = pneg %p31
      $region26: #{tpu_custom_call.1} parent=23 // pred_check_branch
        %158 = sbr.rel (%p156) target = $region28
      $region27: #{tpu_custom_call.1} parent=23 // pred_region
        %s159 = smul.u32 16, %s11
        %p160 = scmp.lt.s32.totalorder %s159, 47
        %s161 = scalar_select %p160, %s159, 47
        %s162 = smul.addr %s161, 8
        %s163 = scalar_lea.vmem %s0, %s162
        %s164 = smul.u32 16, %s11
      $region28: #{tpu_custom_call.1} parent=23 // pred_fallthru
        _
    $region24: #{tpu_custom_call.1} parent=5 // pred_fallthru
      _
    %p165 = scmp.le.s32.totalorder 1, %s11
    %p166 = scmp.lt.s32.totalorder %s11, 4
    %p167 = pnand %p165, %p166
    %p168 = pneg %p167
    // Predicated region
    $region29: #{tpu_custom_call.1} parent=5 // pred_check
      _
    $region30: #{tpu_custom_call.1} parent=5 // pred_check_branch
      %170 = sbr.rel (%p167) target = $region32
    $region31: #{tpu_custom_call.1} parent=5 // pred_region
      %s171 = ssub.s32 %s11, 1
      %s172 = smul.u32 16, %s16
      %p173 = scmp.lt.s32.totalorder %s172, 47
      %s174 = scalar_select %p173, %s172, 47
      %s175 = smul.addr %s174, 8
      %s176 = scalar_lea.vmem %s0, %s175
      %p177 = pneg %p37
      %p178 = pneg %p34
      %p179 = pneg %p58
      %p180 = pneg %p55
      %p181 = pneg %p79
      %p182 = pneg %p76
      %p183 = pneg %p105
      %p184 = pneg %p102
      %s185 = smul.u32 16, %s16
      %p186 = scmp.lt.s32.totalorder %s185, 47
      %s187 = scalar_select %p186, %s185, 47
      %s188 = smul.addr %s187, 8
      %s189 = scalar_lea.vmem %s3, %s188
      %p190 = pneg %p131
      %p191 = pneg %p128
      %s192 = smul.u32 16, %s16
      %p193 = scmp.lt.s32.totalorder %s192, 47
      %s194 = scalar_select %p193, %s192, 47
      %s195 = smul.addr %s194, 4
      %s196 = scalar_lea.vmem %s4, %s195
      %s197 = smul.u32 16, %s16
      %p198 = scmp.lt.s32.totalorder %s197, 47
      %s199 = scalar_select %p198, %s197, 47
      %s200 = smul.addr %s199, 8
      %s201 = scalar_lea.vmem %s0, %s200
      %s202 = smul.u32 16, %s16
      %s203 = smul.u32 16, %s16
      %p204 = scmp.lt.s32.totalorder %s203, 47
      %s205 = scalar_select %p204, %s203, 47
      %s206 = smul.addr %s205, 8
      %s207 = scalar_lea.vmem %s3, %s206
      %s208 = smul.u32 16, %s16
      %s209 = smul.u32 16, %s16
      %p210 = scmp.lt.s32.totalorder %s209, 47
      %s211 = scalar_select %p210, %s209, 47
      %s212 = smul.addr %s211, 4
      %s213 = scalar_lea.vmem %s4, %s212
      %s214 = smul.u32 16, %s16
      %v215 = vld [vmem:[%s201] sm:$0xff]
      %v216 = vld [vmem:[%s201 + $0x8] sm:$0xff]
      %v217 = vld [vmem:[%s201 + $0x10] sm:$0xff]
      %v218 = vld [vmem:[%s201 + $0x18] sm:$0xff]
      %v219 = vld [vmem:[%s201 + $0x20] sm:$0xff]
      %v220 = vld [vmem:[%s201 + $0x28] sm:$0xff]
      %v221 = vld [vmem:[%s201 + $0x30] sm:$0xff]
      %v222 = vld [vmem:[%s201 + $0x38] sm:$0xff]
      %v223 = vld [vmem:[%s201 + $0x40] sm:$0xff]
      %v224 = vld [vmem:[%s201 + $0x48] sm:$0xff]
      %v225 = vld [vmem:[%s201 + $0x50] sm:$0xff]
      %v226 = vld [vmem:[%s201 + $0x58] sm:$0xff]
      %v227 = vld [vmem:[%s201 + $0x60] sm:$0xff]
      %v228 = vld [vmem:[%s201 + $0x68] sm:$0xff]
      %v229 = vld [vmem:[%s201 + $0x70] sm:$0xff]
      %v230 = vld [vmem:[%s201 + $0x78] sm:$0xff]
      %v231 = vld [vmem:[%s1] sm:$0xff]
      %v232 = vld [vmem:[%s1 + $0x8] sm:$0xff]
      %v233 = vld [vmem:[%s1 + $0x10] sm:$0x7f]
      %v234 = vld [vmem:[%s2] sm:$0x1]
      %v236 = vlaneseq
      %v237 = vshrl.u32 %v236, 7
      %v238 = vsub.s32 0, %v237
      %v239 = vrot.slane %v234, %v238
      %vm241 = vcmask 187392
      %v243 = vsel %vm241, %v215, 0
      %v246 = vsel %vm241, %v216, 0
      %v249 = vsel %vm241, %v217, 0
      %v252 = vsel %vm241, %v218, 0
      %v255 = vsel %vm241, %v219, 0
      %v258 = vsel %vm241, %v220, 0
      %v261 = vsel %vm241, %v221, 0
      %v264 = vsel %vm241, %v222, 0
      %v267 = vsel %vm241, %v223, 0
      %v270 = vsel %vm241, %v224, 0
      %v273 = vsel %vm241, %v225, 0
      %v276 = vsel %vm241, %v226, 0
      %v279 = vsel %vm241, %v227, 0
      %v282 = vsel %vm241, %v228, 0
      %v285 = vsel %vm241, %v229, 0
      %v288 = vsel %vm241, %v230, 0
      %vm290 = vcmask 1046528
      %v292 = vsel %vm290, %v233, 0
      %294 = vmatprep.subr.mxu0 0.0
      %295 = vmatpush1.msra.mxu0 %v231
      %296 = vmatprep.subr.mxu0 0.0
      %297 = vmatpush1.msra.mxu0 %v232
      %298 = vmatprep.subr.mxu0 0.0
      %299 = vmatpush1.msra.mxu0 %v292
      %300 = vmatprep.subr.mxu0 0.0
      %301 = vmatpush1.msra.mxu0 0.0
      %302 = vmatprep.subr.mxu0 0.0
      %303 = vmatpush1.msra.mxu0 0.0
      %304 = vmatprep.subr.mxu0 0.0
      %305 = vmatpush1.msra.mxu0 0.0
      %306 = vmatprep.subr.mxu0 0.0
      %307 = vmatpush1.msra.mxu0 0.0
      %308 = vmatprep.subr.mxu0 0.0
      %309 = vmatpush1.msra.mxu0 0.0
      %310 = vmatprep.subr.mxu0 0.0
      %311 = vmatpush1.msra.mxu0 0.0
      %312 = vmatprep.subr.mxu0 0.0
      %313 = vmatpush1.msra.mxu0 0.0
      %314 = vmatprep.subr.mxu0 0.0
      %315 = vmatpush1.msra.mxu0 0.0
      %316 = vmatprep.subr.mxu0 0.0
      %317 = vmatpush1.msra.mxu0 0.0
      %318 = vmatprep.subr.mxu0 0.0
      %319 = vmatpush1.msra.mxu0 0.0
      %320 = vmatprep.subr.mxu0 0.0
      %321 = vmatpush1.msra.mxu0 0.0
      %322 = vmatprep.subr.mxu0 0.0
      %323 = vmatpush1.msra.mxu0 0.0
      %324 = vmatprep.subr.mxu0 0.0
      %325 = vmatpush1.msra.mxu0 0.0
      %326 = vmatprep.subr.mxu0 0.0
      %327 = vmatpush1.msra.mxu0 0.0
      %328 = vmatprep.subr.mxu0 0.0
      %329 = vmatpush1.msra.mxu0 0.0
      %330 = vmatprep.subr.mxu0 0.0
      %331 = vmatpush1.msra.mxu0 0.0
      %332 = vmatprep.subr.mxu0 0.0
      %333 = vmatpush1.msra.mxu0 0.0
      %334 = vmatprep.subr.mxu0 0.0
      %335 = vmatpush1.msra.mxu0 0.0
      %336 = vmatprep.subr.mxu0 0.0
      %337 = vmatpush1.msra.mxu0 0.0
      %338 = vmatprep.subr.mxu0 0.0
      %339 = vmatpush1.msra.mxu0 0.0
      %340 = vmatprep.subr.mxu0 0.0
      %341 = vmatpush1.msra.mxu0 0.0
      %342 = vmatprep.subr.mxu0 0.0
      %343 = vmatpush1.msra.mxu0 0.0
      %344 = vmatprep.subr.mxu0 0.0
      %345 = vmatpush1.msra.mxu0 0.0
      %346 = vmatprep.subr.mxu0 0.0
      %347 = vmatpush1.msra.mxu0 0.0
      %348 = vmatprep.subr.mxu0 0.0
      %349 = vmatpush1.msra.mxu0 0.0
      %350 = vmatprep.subr.mxu0 0.0
      %351 = vmatpush1.msra.mxu0 0.0
      %352 = vmatprep.subr.mxu0 0.0
      %353 = vmatpush1.msra.mxu0 0.0
      %354 = vmatprep.subr.mxu0 0.0
      %355 = vmatpush1.msra.mxu0 0.0
      %356 = vmatprep.subr.mxu0 0.0
      %357 = vmatpush1.msra.mxu0 0.0
      %358 = vmatprep.mubr.f32.mxu0 0.0
      %359 = vmatmul.mubr.f32.gmra.mrb[0].mxu0 %v243
      %v360 = vpop.f32.mrb[0].mxu0
      %v361 = vadd.f32 %v239, %v360
      %v362 = vpop.f32.mrb[0].mxu0
      %363 = vmatprep.mubr.f32.mxu0 0.0
      %364 = vmatmul.mubr.f32.gmra.mrb[0].mxu0 %v246
      %v365 = vpop.f32.mrb[0].mxu0
      %v366 = vadd.f32 %v239, %v365
      %v367 = vpop.f32.mrb[0].mxu0
      %368 = vmatprep.mubr.f32.mxu0 0.0
      %369 = vmatmul.mubr.f32.gmra.mrb[0].mxu0 %v249
      %v370 = vpop.f32.mrb[0].mxu0
      %v371 = vadd.f32 %v239, %v370
      %v372 = vpop.f32.mrb[0].mxu0
      %373 = vmatprep.mubr.f32.mxu0 0.0
      %374 = vmatmul.mubr.f32.gmra.mrb[0].mxu0 %v252
      %v375 = vpop.f32.mrb[0].mxu0
      %v376 = vadd.f32 %v239, %v375
      %v377 = vpop.f32.mrb[0].mxu0
      %378 = vmatprep.mubr.f32.mxu0 0.0
      %379 = vmatmul.mubr.f32.gmra.mrb[0].mxu0 %v255
      %v380 = vpop.f32.mrb[0].mxu0
      %v381 = vadd.f32 %v239, %v380
      %v382 = vpop.f32.mrb[0].mxu0
      %383 = vmatprep.mubr.f32.mxu0 0.0
      %384 = vmatmul.mubr.f32.gmra.mrb[0].mxu0 %v258
      %v385 = vpop.f32.mrb[0].mxu0
      %v386 = vadd.f32 %v239, %v385
      %v387 = vpop.f32.mrb[0].mxu0
      %388 = vmatprep.mubr.f32.mxu0 0.0
      %389 = vmatmul.mubr.f32.gmra.mrb[0].mxu0 %v261
      %v390 = vpop.f32.mrb[0].mxu0
      %v391 = vadd.f32 %v239, %v390
      %v392 = vpop.f32.mrb[0].mxu0
      %393 = vmatprep.mubr.f32.mxu0 0.0
      %394 = vmatmul.mubr.f32.gmra.mrb[0].mxu0 %v264
      %v395 = vpop.f32.mrb[0].mxu0
      %v396 = vadd.f32 %v239, %v395
      %v397 = vpop.f32.mrb[0].mxu0
      %398 = vmatprep.mubr.f32.mxu0 0.0
      %399 = vmatmul.mubr.f32.gmra.mrb[0].mxu0 %v267
      %v400 = vpop.f32.mrb[0].mxu0
      %v401 = vadd.f32 %v239, %v400
      %v402 = vpop.f32.mrb[0].mxu0
      %403 = vmatprep.mubr.f32.mxu0 0.0
      %404 = vmatmul.mubr.f32.gmra.mrb[0].mxu0 %v270
      %v405 = vpop.f32.mrb[0].mxu0
      %v406 = vadd.f32 %v239, %v405
      %v407 = vpop.f32.mrb[0].mxu0
      %408 = vmatprep.mubr.f32.mxu0 0.0
      %409 = vmatmul.mubr.f32.gmra.mrb[0].mxu0 %v273
      %v410 = vpop.f32.mrb[0].mxu0
      %v411 = vadd.f32 %v239, %v410
      %v412 = vpop.f32.mrb[0].mxu0
      %413 = vmatprep.mubr.f32.mxu0 0.0
      %414 = vmatmul.mubr.f32.gmra.mrb[0].mxu0 %v276
      %v415 = vpop.f32.mrb[0].mxu0
      %v416 = vadd.f32 %v239, %v415
      %v417 = vpop.f32.mrb[0].mxu0
      %418 = vmatprep.mubr.f32.mxu0 0.0
      %419 = vmatmul.mubr.f32.gmra.mrb[0].mxu0 %v279
      %v420 = vpop.f32.mrb[0].mxu0
      %v421 = vadd.f32 %v239, %v420
      %v422 = vpop.f32.mrb[0].mxu0
      %423 = vmatprep.mubr.f32.mxu0 0.0
      %424 = vmatmul.mubr.f32.gmra.mrb[0].mxu0 %v282
      %v425 = vpop.f32.mrb[0].mxu0
      %v426 = vadd.f32 %v239, %v425
      %v427 = vpop.f32.mrb[0].mxu0
      %428 = vmatprep.mubr.f32.mxu0 0.0
      %429 = vmatmul.mubr.f32.gmra.mrb[0].mxu0 %v285
      %v430 = vpop.f32.mrb[0].mxu0
      %v431 = vadd.f32 %v239, %v430
      %v432 = vpop.f32.mrb[0].mxu0
      %433 = vmatprep.mubr.f32.mxu0 0.0
      %434 = vmatmul.mubr.f32.gmra.mrb[0].mxu0 %v288
      %v435 = vpop.f32.mrb[0].mxu0
      %v436 = vadd.f32 %v239, %v435
      %v437 = vpop.f32.mrb[0].mxu0
      %438 = vdwg.mxu0
      %v439 = vpack.c.bf16 %v366, %v361
      %v440 = vpack.c.bf16 %v376, %v371
      %v441 = vpack.c.bf16 %v386, %v381
      %v442 = vpack.c.bf16 %v396, %v391
      %v443 = vpack.c.bf16 %v406, %v401
      %v444 = vpack.c.bf16 %v416, %v411
      %v445 = vpack.c.bf16 %v426, %v421
      %v446 = vpack.c.bf16 %v436, %v431
      %v455 = vunpack.c.l.b16 %v439
      %v456 = vunpack.c.h.b16 %v439
      %v457 = vunpack.c.l.b16 %v440
      %v458 = vunpack.c.h.b16 %v440
      %v459 = vunpack.c.l.b16 %v441
      %v460 = vunpack.c.h.b16 %v441
      %v461 = vunpack.c.l.b16 %v442
      %v462 = vunpack.c.h.b16 %v442
      %v463 = vunpack.c.l.b16 %v443
      %v464 = vunpack.c.h.b16 %v443
      %v465 = vunpack.c.l.b16 %v444
      %v466 = vunpack.c.h.b16 %v444
      %v467 = vunpack.c.l.b16 %v445
      %v468 = vunpack.c.h.b16 %v445
      %v469 = vunpack.c.l.b16 %v446
      %v470 = vunpack.c.h.b16 %v446
      %v471 = vpack.c.b16 %v455, %v455
      %v472 = vpack.c.b16 %v456, %v456
      %v473 = vpack.c.b16 %v457, %v457
      %v474 = vpack.c.b16 %v458, %v458
      %v475 = vpack.c.b16 %v459, %v459
      %v476 = vpack.c.b16 %v460, %v460
      %v477 = vpack.c.b16 %v461, %v461
      %v478 = vpack.c.b16 %v462, %v462
      %v479 = vpack.c.b16 %v463, %v463
      %v480 = vpack.c.b16 %v464, %v464
      %v481 = vpack.c.b16 %v465, %v465
      %v482 = vpack.c.b16 %v466, %v466
      %v483 = vpack.c.b16 %v467, %v467
      %v484 = vpack.c.b16 %v468, %v468
      %v485 = vpack.c.b16 %v469, %v469
      %v486 = vpack.c.b16 %v470, %v470
      %487 = vrot.lane.b32.xlu0 %v471, 125
      %v488 = vpop.permute.xlu0 %487
      %489 = vrot.lane.b32.xlu0 %v472, 125
      %v490 = vpop.permute.xlu0 %489
      %491 = vrot.lane.b32.xlu0 %v473, 125
      %v492 = vpop.permute.xlu0 %491
      %493 = vrot.lane.b32.xlu0 %v474, 125
      %v494 = vpop.permute.xlu0 %493
      %495 = vrot.lane.b32.xlu0 %v475, 125
      %v496 = vpop.permute.xlu0 %495
      %497 = vrot.lane.b32.xlu0 %v476, 125
      %v498 = vpop.permute.xlu0 %497
      %499 = vrot.lane.b32.xlu0 %v477, 125
      %v500 = vpop.permute.xlu0 %499
      %501 = vrot.lane.b32.xlu0 %v478, 125
      %v502 = vpop.permute.xlu0 %501
      %503 = vrot.lane.b32.xlu0 %v479, 125
      %v504 = vpop.permute.xlu0 %503
      %505 = vrot.lane.b32.xlu0 %v480, 125
      %v506 = vpop.permute.xlu0 %505
      %507 = vrot.lane.b32.xlu0 %v481, 125
      %v508 = vpop.permute.xlu0 %507
      %509 = vrot.lane.b32.xlu0 %v482, 125
      %v510 = vpop.permute.xlu0 %509
      %511 = vrot.lane.b32.xlu0 %v483, 125
      %v512 = vpop.permute.xlu0 %511
      %513 = vrot.lane.b32.xlu0 %v484, 125
      %v514 = vpop.permute.xlu0 %513
      %515 = vrot.lane.b32.xlu0 %v485, 125
      %v516 = vpop.permute.xlu0 %515
      %517 = vrot.lane.b32.xlu0 %v486, 125
      %v518 = vpop.permute.xlu0 %517
      %vm535 = vcmask 19456
      %536 = vst.msk [vmem:[%s213] sm:$0xf] %vm535, %v488
      %537 = vst.msk [vmem:[%s213 + $0x4] sm:$0xf] %vm535, %v490
      %538 = vst.msk [vmem:[%s213 + $0x8] sm:$0xf] %vm535, %v492
      %539 = vst.msk [vmem:[%s213 + $0xc] sm:$0xf] %vm535, %v494
      %540 = vst.msk [vmem:[%s213 + $0x10] sm:$0xf] %vm535, %v496
      %541 = vst.msk [vmem:[%s213 + $0x14] sm:$0xf] %vm535, %v498
      %542 = vst.msk [vmem:[%s213 + $0x18] sm:$0xf] %vm535, %v500
      %543 = vst.msk [vmem:[%s213 + $0x1c] sm:$0xf] %vm535, %v502
      %544 = vst.msk [vmem:[%s213 + $0x20] sm:$0xf] %vm535, %v504
      %545 = vst.msk [vmem:[%s213 + $0x24] sm:$0xf] %vm535, %v506
      %546 = vst.msk [vmem:[%s213 + $0x28] sm:$0xf] %vm535, %v508
      %547 = vst.msk [vmem:[%s213 + $0x2c] sm:$0xf] %vm535, %v510
      %548 = vst.msk [vmem:[%s213 + $0x30] sm:$0xf] %vm535, %v512
      %549 = vst.msk [vmem:[%s213 + $0x34] sm:$0xf] %vm535, %v514
      %550 = vst.msk [vmem:[%s213 + $0x38] sm:$0xf] %vm535, %v516
      %551 = vst.msk [vmem:[%s213 + $0x3c] sm:$0xf] %vm535, %v518
      %v552 = vmul.f32 %v361, %v361
      %v553 = vmul.f32 %v366, %v366
      %v554 = vmul.f32 %v371, %v371
      %v555 = vmul.f32 %v376, %v376
      %v556 = vmul.f32 %v381, %v381
      %v557 = vmul.f32 %v386, %v386
      %v558 = vmul.f32 %v391, %v391
      %v559 = vmul.f32 %v396, %v396
      %v560 = vmul.f32 %v401, %v401
      %v561 = vmul.f32 %v406, %v406
      %v562 = vmul.f32 %v411, %v411
      %v563 = vmul.f32 %v416, %v416
      %v564 = vmul.f32 %v421, %v421
      %v565 = vmul.f32 %v426, %v426
      %v566 = vmul.f32 %v431, %v431
      %v567 = vmul.f32 %v436, %v436
      %vm568 = vcmask 23552
      %v569 = vsel %vm568, %v552, 0.0
      %570 = vadd.xlane.f32.xlu0 %v569
      %v571 = vpop.xlane.xlu0 %570
      %v572 = vsel %vm568, %v553, 0.0
      %573 = vadd.xlane.f32.xlu0 %v572
      %v574 = vpop.xlane.xlu0 %573
      %v575 = vsel %vm568, %v554, 0.0
      %576 = vadd.xlane.f32.xlu0 %v575
      %v577 = vpop.xlane.xlu0 %576
      %v578 = vsel %vm568, %v555, 0.0
      %579 = vadd.xlane.f32.xlu0 %v578
      %v580 = vpop.xlane.xlu0 %579
      %v581 = vsel %vm568, %v556, 0.0
      %582 = vadd.xlane.f32.xlu0 %v581
      %v583 = vpop.xlane.xlu0 %582
      %v584 = vsel %vm568, %v557, 0.0
      %585 = vadd.xlane.f32.xlu0 %v584
      %v586 = vpop.xlane.xlu0 %585
      %v587 = vsel %vm568, %v558, 0.0
      %588 = vadd.xlane.f32.xlu0 %v587
      %v589 = vpop.xlane.xlu0 %588
      %v590 = vsel %vm568, %v559, 0.0
      %591 = vadd.xlane.f32.xlu0 %v590
      %v592 = vpop.xlane.xlu0 %591
      %v593 = vsel %vm568, %v560, 0.0
      %594 = vadd.xlane.f32.xlu0 %v593
      %v595 = vpop.xlane.xlu0 %594
      %v596 = vsel %vm568, %v561, 0.0
      %597 = vadd.xlane.f32.xlu0 %v596
      %v598 = vpop.xlane.xlu0 %597
      %v599 = vsel %vm568, %v562, 0.0
      %600 = vadd.xlane.f32.xlu0 %v599
      %v601 = vpop.xlane.xlu0 %600
      %v602 = vsel %vm568, %v563, 0.0
      %603 = vadd.xlane.f32.xlu0 %v602
      %v604 = vpop.xlane.xlu0 %603
      %v605 = vsel %vm568, %v564, 0.0
      %606 = vadd.xlane.f32.xlu0 %v605
      %v607 = vpop.xlane.xlu0 %606
      %v608 = vsel %vm568, %v565, 0.0
      %609 = vadd.xlane.f32.xlu0 %v608
      %v610 = vpop.xlane.xlu0 %609
      %v611 = vsel %vm568, %v566, 0.0
      %612 = vadd.xlane.f32.xlu0 %v611
      %v613 = vpop.xlane.xlu0 %612
      %v614 = vsel %vm568, %v567, 0.0
      %615 = vadd.xlane.f32.xlu0 %v614
      %v616 = vpop.xlane.xlu0 %615
      %s617 = smul.u32 %s16, 128
      %v618 = vlaneseq
      %v619 = vshrl.u32 %v618, 7
      %v620 = vadd.s32 %v619, 8
      %v621 = vadd.s32 %v619, 16
      %v622 = vadd.s32 %v619, 24
      %v623 = vadd.s32 %v619, 32
      %v624 = vadd.s32 %v619, 40
      %v625 = vadd.s32 %v619, 48
      %v626 = vadd.s32 %v619, 56
      %v627 = vadd.s32 %v619, 64
      %v628 = vadd.s32 %v619, 72
      %v629 = vadd.s32 %v619, 80
      %v630 = vadd.s32 %v619, 88
      %v631 = vadd.s32 %v619, 96
      %v632 = vadd.s32 %v619, 104
      %v633 = vadd.s32 %v619, 112
      %v634 = vadd.s32 %v619, 120
      %v635 = vstv %s617
      %v636 = vadd.s32 %v635, %v619
      %v637 = vadd.s32 %v635, %v620
      %v638 = vadd.s32 %v635, %v621
      %v639 = vadd.s32 %v635, %v622
      %v640 = vadd.s32 %v635, %v623
      %v641 = vadd.s32 %v635, %v624
      %v642 = vadd.s32 %v635, %v625
      %v643 = vadd.s32 %v635, %v626
      %v644 = vadd.s32 %v635, %v627
      %v645 = vadd.s32 %v635, %v628
      %v646 = vadd.s32 %v635, %v629
      %v647 = vadd.s32 %v635, %v630
      %v648 = vadd.s32 %v635, %v631
      %v649 = vadd.s32 %v635, %v632
      %v650 = vadd.s32 %v635, %v633
      %v651 = vadd.s32 %v635, %v634
      %vm652 = vcmp.lt.s32.totalorder %v636, 300
      %vm653 = vcmp.lt.s32.totalorder %v637, 300
      %vm654 = vcmp.lt.s32.totalorder %v638, 300
      %vm655 = vcmp.lt.s32.totalorder %v639, 300
      %vm656 = vcmp.lt.s32.totalorder %v640, 300
      %vm657 = vcmp.lt.s32.totalorder %v641, 300
      %vm658 = vcmp.lt.s32.totalorder %v642, 300
      %vm659 = vcmp.lt.s32.totalorder %v643, 300
      %vm660 = vcmp.lt.s32.totalorder %v644, 300
      %vm661 = vcmp.lt.s32.totalorder %v645, 300
      %vm662 = vcmp.lt.s32.totalorder %v646, 300
      %vm663 = vcmp.lt.s32.totalorder %v647, 300
      %vm664 = vcmp.lt.s32.totalorder %v648, 300
      %vm665 = vcmp.lt.s32.totalorder %v649, 300
      %vm666 = vcmp.lt.s32.totalorder %v650, 300
      %vm667 = vcmp.lt.s32.totalorder %v651, 300
      %v668 = vsel %vm652, %v571, 1e+30
      %v669 = vsel %vm653, %v574, 1e+30
      %v670 = vsel %vm654, %v577, 1e+30
      %v671 = vsel %vm655, %v580, 1e+30
      %v672 = vsel %vm656, %v583, 1e+30
      %v673 = vsel %vm657, %v586, 1e+30
      %v674 = vsel %vm658, %v589, 1e+30
      %v675 = vsel %vm659, %v592, 1e+30
      %v676 = vsel %vm660, %v595, 1e+30
      %v677 = vsel %vm661, %v598, 1e+30
      %v678 = vsel %vm662, %v601, 1e+30
      %v679 = vsel %vm663, %v604, 1e+30
      %v680 = vsel %vm664, %v607, 1e+30
      %v681 = vsel %vm665, %v610, 1e+30
      %v682 = vsel %vm666, %v613, 1e+30
      %v683 = vsel %vm667, %v616, 1e+30
      %v684 = vsel %vm568, %v361, %v668
      %v685 = vsel %vm568, %v366, %v669
      %v686 = vsel %vm568, %v371, %v670
      %v687 = vsel %vm568, %v376, %v671
      %v688 = vsel %vm568, %v381, %v672
      %v689 = vsel %vm568, %v386, %v673
      %v690 = vsel %vm568, %v391, %v674
      %v691 = vsel %vm568, %v396, %v675
      %v692 = vsel %vm568, %v401, %v676
      %v693 = vsel %vm568, %v406, %v677
      %v694 = vsel %vm568, %v411, %v678
      %v695 = vsel %vm568, %v416, %v679
      %v696 = vsel %vm568, %v421, %v680
      %v697 = vsel %vm568, %v426, %v681
      %v698 = vsel %vm568, %v431, %v682
      %v699 = vsel %vm568, %v436, %v683
      %vm700 = vcmask 31744
      %701 = vst.msk [vmem:[%s207] sm:$0xff] %vm700, %v684
      %702 = vst.msk [vmem:[%s207 + $0x8] sm:$0xff] %vm700, %v685
      %703 = vst.msk [vmem:[%s207 + $0x10] sm:$0xff] %vm700, %v686
      %704 = vst.msk [vmem:[%s207 + $0x18] sm:$0xff] %vm700, %v687
      %705 = vst.msk [vmem:[%s207 + $0x20] sm:$0xff] %vm700, %v688
      %706 = vst.msk [vmem:[%s207 + $0x28] sm:$0xff] %vm700, %v689
      %707 = vst.msk [vmem:[%s207 + $0x30] sm:$0xff] %vm700, %v690
      %708 = vst.msk [vmem:[%s207 + $0x38] sm:$0xff] %vm700, %v691
      %709 = vst.msk [vmem:[%s207 + $0x40] sm:$0xff] %vm700, %v692
      %710 = vst.msk [vmem:[%s207 + $0x48] sm:$0xff] %vm700, %v693
      %711 = vst.msk [vmem:[%s207 + $0x50] sm:$0xff] %vm700, %v694
      %712 = vst.msk [vmem:[%s207 + $0x58] sm:$0xff] %vm700, %v695
      %713 = vst.msk [vmem:[%s207 + $0x60] sm:$0xff] %vm700, %v696
      %714 = vst.msk [vmem:[%s207 + $0x68] sm:$0xff] %vm700, %v697
      %715 = vst.msk [vmem:[%s207 + $0x70] sm:$0xff] %vm700, %v698
      %716 = vst.msk [vmem:[%s207 + $0x78] sm:$0xff] %vm700, %v699
      %s717 = smul.u32 16, %s16
      %p718 = scmp.lt.s32.totalorder %s717, 47
      %s719 = scalar_select %p718, %s717, 47
      %s720 = smul.addr %s719, 8
      %s721 = scalar_lea.vmem %s3, %s720
      %s722 = smul.u32 16, %s16
      %p723 = scmp.lt.s32.totalorder %s722, 47
      %s724 = scalar_select %p723, %s722, 47
      %s725 = smul.addr %s724, 4
      %s726 = scalar_lea.vmem %s4, %s725
      // Predicated region
      $region33: #{tpu_custom_call.1} parent=31 // pred_check
        %p727 = pneg %p102
      $region34: #{tpu_custom_call.1} parent=31 // pred_check_branch
        %729 = sbr.rel (%p727) target = $region36
      $region35: #{tpu_custom_call.1} parent=31 // pred_region
        %s730 = smul.u32 16, %s16
      $region36: #{tpu_custom_call.1} parent=31 // pred_fallthru
        _
      // Predicated region
      $region37: #{tpu_custom_call.1} parent=31 // pred_check
        %p731 = pneg %p128
      $region38: #{tpu_custom_call.1} parent=31 // pred_check_branch
        %733 = sbr.rel (%p731) target = $region40
      $region39: #{tpu_custom_call.1} parent=31 // pred_region
        %s734 = smul.u32 16, %s16
      $region40: #{tpu_custom_call.1} parent=31 // pred_fallthru
        _
    $region32: #{tpu_custom_call.1} parent=5 // pred_fallthru
      _
    %p735 = scmp.le.s32.totalorder 2, %s11
    // Predicated region
    $region41: #{tpu_custom_call.1} parent=5 // pred_check
      %p736 = pneg %p735
    $region42: #{tpu_custom_call.1} parent=5 // pred_check_branch
      %738 = sbr.rel (%p736) target = $region44
    $region43: #{tpu_custom_call.1} parent=5 // pred_region
      %s739 = ssub.s32 %s11, 2
      // Predicated region
      $region45: #{tpu_custom_call.1} parent=43 // pred_check
        %p740 = pneg %p108
      $region46: #{tpu_custom_call.1} parent=43 // pred_check_branch
        %742 = sbr.rel (%p740) target = $region48
      $region47: #{tpu_custom_call.1} parent=43 // pred_region
        %s743 = smul.u32 16, %s17
        %p744 = scmp.lt.s32.totalorder %s743, 47
        %s745 = scalar_select %p744, %s743, 47
        %s746 = smul.addr %s745, 8
        %s747 = scalar_lea.vmem %s3, %s746
      $region48: #{tpu_custom_call.1} parent=43 // pred_fallthru
        _
      // Predicated region
      $region49: #{tpu_custom_call.1} parent=43 // pred_check
        %p748 = pneg %p134
      $region50: #{tpu_custom_call.1} parent=43 // pred_check_branch
        %750 = sbr.rel (%p748) target = $region52
      $region51: #{tpu_custom_call.1} parent=43 // pred_region
        %s751 = smul.u32 16, %s17
        %p752 = scmp.lt.s32.totalorder %s751, 47
        %s753 = scalar_select %p752, %s751, 47
        %s754 = smul.addr %s753, 4
        %s755 = scalar_lea.vmem %s4, %s754
      $region52: #{tpu_custom_call.1} parent=43 // pred_fallthru
        _
    $region44: #{tpu_custom_call.1} parent=5 // pred_fallthru
      _
  $region6: #{tpu_custom_call.1} parent=0 // loop_footer
    %s15 = sadd.s32 1, %s11
  $region7: #{tpu_custom_call.1} parent=0 // loop_footer_branch
    %10 = sbr.rel target = $region3
  $region8: #{tpu_custom_call.1} parent=0 // loop_exit
    _

</llo_original>
